<compile_context>
chip_gen: v5e
topology: v5e:2x2
jax: 0.10.0
libtpu: 0.0.40
codegen_flags: <defaults>
</compile_context>

<pallas_src>
import jax
import jax.numpy as jnp
from jax.experimental import pallas as pl
from jax.experimental.pallas import tpu as pltpu


def lstm_regr_kernel(x_ref, wih_ref, whh_ref, b_ref, wlin_ref, blin_ref,
                     out_ref, xproj_ref):
    B = out_ref.shape[0]
    H = whh_ref.shape[0]
    TB = xproj_ref.shape[0]
    T = TB // B

    # Phase 1: hoisted, time-independent input projection as ONE batched MXU
    # pass:  (T*B, E) @ (E, 4H) + (b_ih + b_hh)  ->  (T*B, 4H)
    xproj_ref[...] = (
        jnp.dot(x_ref[...], wih_ref[...], preferred_element_type=jnp.float32)
        + b_ref[...])

    w_hh = whh_ref[...]          # (H, 4H), resident across the recurrence

    # Phase 2: sequential LSTM recurrence, fully unrolled for LLO visibility.
    def step(t, carry):
        h, c = carry
        row = pl.multiple_of(t * B, B)
        gates = xproj_ref[pl.ds(row, B), :] + jnp.dot(
            h, w_hh, preferred_element_type=jnp.float32)        # (B, 4H)
        # Two full-width activations instead of four quarter-vreg ones;
        # PyTorch gate order is [i, f, g, o].
        sig = jax.nn.sigmoid(gates)
        tnh = jnp.tanh(gates)
        i_g = sig[:, 0 * H:1 * H]
        f_g = sig[:, 1 * H:2 * H]
        g_g = tnh[:, 2 * H:3 * H]
        o_g = sig[:, 3 * H:4 * H]
        c_new = f_g * c + i_g * g_g
        h_new = o_g * jnp.tanh(c_new)
        return h_new, c_new

    h0 = jnp.zeros((B, H), jnp.float32)
    c0 = jnp.zeros((B, H), jnp.float32)
    h_last, _ = jax.lax.fori_loop(0, T, step, (h0, c0), unroll=True)

    # Phase 3: linear head on VPU + lane reduction (no 1-column MXU pass):
    #   out = sum(ht[-1] * w_lin, axis=-1) + b_lin
    out_ref[...] = (jnp.sum(h_last * wlin_ref[...], axis=-1, keepdims=True)
                    + blin_ref[0])


def lstm_regr_forward(tokens, lengths, params):
    del lengths  # unused by the PyTorch forward
    emb_table = params["embedding"]                 # (V, E), row 0 is zeros
    x = emb_table[tokens]                           # (B, T, E) embedding lookup
    # self.dropout(p=0.4) -> identity in eval mode.

    B, T, E = x.shape
    H = params["w_hh"].shape[1]

    # Time-major, flattened to (T*B, E) so the input projection is one matmul.
    x_flat = jnp.transpose(x, (1, 0, 2)).reshape(T * B, E).astype(jnp.float32)
    w_ih_t = params["w_ih"].T                                 # (E, 4H)
    w_hh_t = params["w_hh"].T                                 # (H, 4H)
    b = (params["b_ih"] + params["b_hh"]).reshape(1, 4 * H)   # (1, 4H)
    w_lin = params["w_lin"].reshape(1, H)                     # (1, H)
    b_lin = params["b_lin"].reshape(1).astype(jnp.float32)    # (1,) -> SMEM

    out = pl.pallas_call(
        lstm_regr_kernel,
        out_shape=jax.ShapeDtypeStruct((B, 1), jnp.float32),
        in_specs=[
            pl.BlockSpec(memory_space=pltpu.MemorySpace.VMEM),   # x_flat
            pl.BlockSpec(memory_space=pltpu.MemorySpace.VMEM),   # W_ih^T
            pl.BlockSpec(memory_space=pltpu.MemorySpace.VMEM),   # W_hh^T
            pl.BlockSpec(memory_space=pltpu.MemorySpace.VMEM),   # combined bias
            pl.BlockSpec(memory_space=pltpu.MemorySpace.VMEM),   # w_lin row
            pl.BlockSpec(memory_space=pltpu.MemorySpace.SMEM),   # b_lin scalar
        ],
        out_specs=pl.BlockSpec(memory_space=pltpu.MemorySpace.VMEM),
        scratch_shapes=[pltpu.VMEM((T * B, 4 * H), jnp.float32)],  # x_proj
    )(x_flat, w_ih_t, w_hh_t, b, w_lin, b_lin)
    return out


def init_params(key, vocab_size, embedding_dim, hidden_dim):
    ks = jax.random.split(key, 7)
    emb = jax.random.normal(ks[0], (vocab_size, embedding_dim), jnp.float32)
    emb = emb.at[0].set(0.0)  # padding_idx=0
    s = 1.0 / jnp.sqrt(hidden_dim)
    params = {
        "embedding": emb,
        "w_ih": jax.random.uniform(ks[1], (4 * hidden_dim, embedding_dim),
                                   jnp.float32, -s, s),
        "w_hh": jax.random.uniform(ks[2], (4 * hidden_dim, hidden_dim),
                                   jnp.float32, -s, s),
        "b_ih": jax.random.uniform(ks[3], (4 * hidden_dim,), jnp.float32, -s, s),
        "b_hh": jax.random.uniform(ks[4], (4 * hidden_dim,), jnp.float32, -s, s),
        "w_lin": jax.random.uniform(ks[5], (1, hidden_dim), jnp.float32, -s, s),
        "b_lin": jax.random.uniform(ks[6], (1,), jnp.float32, -s, s),
    }
    return params


def reference_forward(tokens, params):
    """Pure-JAX reference matching PyTorch LSTM semantics (eval mode)."""
    x = params["embedding"][tokens]                          # (B, T, E)
    B, T, E = x.shape
    H = params["w_hh"].shape[1]
    h = jnp.zeros((B, H), jnp.float32)
    c = jnp.zeros((B, H), jnp.float32)

    def step(carry, x_t):
        h, c = carry
        gates = (x_t @ params["w_ih"].T + params["b_ih"]
                 + h @ params["w_hh"].T + params["b_hh"])
        i_g = jax.nn.sigmoid(gates[:, 0 * H:1 * H])
        f_g = jax.nn.sigmoid(gates[:, 1 * H:2 * H])
        g_g = jnp.tanh(gates[:, 2 * H:3 * H])
        o_g = jax.nn.sigmoid(gates[:, 3 * H:4 * H])
        c_new = f_g * c + i_g * g_g
        h_new = o_g * jnp.tanh(c_new)
        return (h_new, c_new), None

    (h, c), _ = jax.lax.scan(step, (h, c), jnp.transpose(x, (1, 0, 2)))
    return h @ params["w_lin"].T + params["b_lin"]


if __name__ == "__main__":
    VOCAB, EMB, HIDDEN = 50, 16, 32
    B, T = 8, 8

    key = jax.random.PRNGKey(0)
    k_tok, k_param = jax.random.split(key)
    tokens = jax.random.randint(k_tok, (B, T), 0, VOCAB, dtype=jnp.int32)
    lengths = jnp.full((B,), T, dtype=jnp.int32)  # unused, matches forward(x, l)
    params = init_params(k_param, VOCAB, EMB, HIDDEN)

    out = lstm_regr_forward(tokens, lengths, params)
    out = jax.block_until_ready(out)

    ref = reference_forward(tokens, params)
    assert out.shape == (B, 1)
    assert jnp.allclose(out, ref, atol=1e-4, rtol=1e-4), (out, ref)

    print("KERNEL_OK")
</pallas_src>

<mosaic_0001>
module attributes {stable_mosaic.version = 11 : i64} {
  func.func @lstm_regr_kernel(%arg0: memref<64x16xf32, #tpu.memory_space<vmem>>, %arg1: memref<16x128xf32, #tpu.memory_space<vmem>>, %arg2: memref<32x128xf32, #tpu.memory_space<vmem>>, %arg3: memref<1x128xf32, #tpu.memory_space<vmem>>, %arg4: memref<1x32xf32, #tpu.memory_space<vmem>>, %arg5: memref<1xf32, #tpu.memory_space<smem>>, %arg6: memref<8x1xf32, #tpu.memory_space<vmem>>, %arg7: memref<64x128xf32, #tpu.memory_space<vmem>>) attributes {dimension_semantics = [], scalar_prefetch = 0 : i64, scratch_operands = 1 : i64, tpu.core_type = #tpu.core_type<tc>} {
    %c0 = arith.constant 0 : index
    %c0_0 = arith.constant 0 : index
    %0 = vector.load %arg0[%c0, %c0_0] : memref<64x16xf32, #tpu.memory_space<vmem>>, vector<64x16xf32>
    %c0_1 = arith.constant 0 : index
    %c0_2 = arith.constant 0 : index
    %1 = vector.load %arg1[%c0_1, %c0_2] : memref<16x128xf32, #tpu.memory_space<vmem>>, vector<16x128xf32>
    %cst = arith.constant dense<0.000000e+00> : vector<64x128xf32>
    %2 = tpu.matmul %0, %1, %cst {dimension_numbers = #tpu.dot_dimension_numbers<[1], [0], [0], [1], [0, 0, 1, 1], [], []>} : vector<64x16xf32>, vector<16x128xf32>, vector<64x128xf32> -> vector<64x128xf32>
    %c0_3 = arith.constant 0 : index
    %c0_4 = arith.constant 0 : index
    %3 = vector.load %arg3[%c0_3, %c0_4] : memref<1x128xf32, #tpu.memory_space<vmem>>, vector<1x128xf32>
    %4 = vector.broadcast %3 : vector<1x128xf32> to vector<64x128xf32>
    %5 = arith.addf %2, %4 : vector<64x128xf32>
    %c0_5 = arith.constant 0 : index
    %c0_6 = arith.constant 0 : index
    %6 = vector.load %arg7[%c0_5, %c0_6] : memref<64x128xf32, #tpu.memory_space<vmem>>, vector<64x128xf32>
    tpu.vector_store %arg7[%c0_5, %c0_6], %5 {strides = array<i32>} : memref<64x128xf32, #tpu.memory_space<vmem>>, vector<64x128xf32>,
    %c0_7 = arith.constant 0 : index
    %c0_8 = arith.constant 0 : index
    %7 = vector.load %arg2[%c0_7, %c0_8] : memref<32x128xf32, #tpu.memory_space<vmem>>, vector<32x128xf32>
    %cst_9 = arith.constant 0.000000e+00 : f32
    %8 = vector.broadcast %cst_9 : f32 to vector<8x32xf32>
    %cst_10 = arith.constant 0.000000e+00 : f32
    %9 = vector.broadcast %cst_10 : f32 to vector<8x32xf32>
    %c0_i32 = arith.constant 0 : i32
    %c8_i32 = arith.constant 8 : i32
    %10 = arith.muli %c0_i32, %c8_i32 : i32
    %11 = tpu.assume_multiple %10, 8 : i32
    %12 = arith.index_cast %11 : i32 to index
    %c0_11 = arith.constant 0 : index
    %13 = vector.load %arg7[%12, %c0_11] : memref<64x128xf32, #tpu.memory_space<vmem>>, vector<8x128xf32>
    %cst_12 = arith.constant dense<0.000000e+00> : vector<8x128xf32>
    %14 = tpu.matmul %8, %7, %cst_12 {dimension_numbers = #tpu.dot_dimension_numbers<[1], [0], [0], [1], [0, 0, 1, 1], [], []>} : vector<8x32xf32>, vector<32x128xf32>, vector<8x128xf32> -> vector<8x128xf32>
    %15 = arith.addf %13, %14 : vector<8x128xf32>
    %16 = arith.negf %15 : vector<8x128xf32>
    %17 = math.exp %16 : vector<8x128xf32>
    %cst_13 = arith.constant 1.000000e+00 : f32
    %18 = vector.broadcast %cst_13 : f32 to vector<8x128xf32>
    %19 = arith.addf %18, %17 : vector<8x128xf32>
    %20 = arith.divf %18, %19 : vector<8x128xf32>
    %21 = math.tanh %15 : vector<8x128xf32>
    %22 = vector.extract_strided_slice %20 {offsets = [0, 0], sizes = [8, 32], strides = [1, 1]} : vector<8x128xf32> to vector<8x32xf32>
    %23 = vector.extract_strided_slice %20 {offsets = [0, 32], sizes = [8, 32], strides = [1, 1]} : vector<8x128xf32> to vector<8x32xf32>
    %24 = vector.extract_strided_slice %21 {offsets = [0, 64], sizes = [8, 32], strides = [1, 1]} : vector<8x128xf32> to vector<8x32xf32>
    %25 = vector.extract_strided_slice %20 {offsets = [0, 96], sizes = [8, 32], strides = [1, 1]} : vector<8x128xf32> to vector<8x32xf32>
    %26 = arith.mulf %23, %9 : vector<8x32xf32>
    %27 = arith.mulf %22, %24 : vector<8x32xf32>
    %28 = arith.addf %26, %27 : vector<8x32xf32>
    %29 = math.tanh %28 : vector<8x32xf32>
    %30 = arith.mulf %25, %29 : vector<8x32xf32>
    %c1_i32 = arith.constant 1 : i32
    %c8_i32_14 = arith.constant 8 : i32
    %31 = arith.muli %c1_i32, %c8_i32_14 : i32
    %32 = tpu.assume_multiple %31, 8 : i32
    %33 = arith.index_cast %32 : i32 to index
    %c0_15 = arith.constant 0 : index
    %34 = vector.load %arg7[%33, %c0_15] : memref<64x128xf32, #tpu.memory_space<vmem>>, vector<8x128xf32>
    %cst_16 = arith.constant dense<0.000000e+00> : vector<8x128xf32>
    %35 = tpu.matmul %30, %7, %cst_16 {dimension_numbers = #tpu.dot_dimension_numbers<[1], [0], [0], [1], [0, 0, 1, 1], [], []>} : vector<8x32xf32>, vector<32x128xf32>, vector<8x128xf32> -> vector<8x128xf32>
    %36 = arith.addf %34, %35 : vector<8x128xf32>
    %37 = arith.negf %36 : vector<8x128xf32>
    %38 = math.exp %37 : vector<8x128xf32>
    %cst_17 = arith.constant 1.000000e+00 : f32
    %39 = vector.broadcast %cst_17 : f32 to vector<8x128xf32>
    %40 = arith.addf %39, %38 : vector<8x128xf32>
    %41 = arith.divf %39, %40 : vector<8x128xf32>
    %42 = math.tanh %36 : vector<8x128xf32>
    %43 = vector.extract_strided_slice %41 {offsets = [0, 0], sizes = [8, 32], strides = [1, 1]} : vector<8x128xf32> to vector<8x32xf32>
    %44 = vector.extract_strided_slice %41 {offsets = [0, 32], sizes = [8, 32], strides = [1, 1]} : vector<8x128xf32> to vector<8x32xf32>
    %45 = vector.extract_strided_slice %42 {offsets = [0, 64], sizes = [8, 32], strides = [1, 1]} : vector<8x128xf32> to vector<8x32xf32>
    %46 = vector.extract_strided_slice %41 {offsets = [0, 96], sizes = [8, 32], strides = [1, 1]} : vector<8x128xf32> to vector<8x32xf32>
    %47 = arith.mulf %44, %28 : vector<8x32xf32>
    %48 = arith.mulf %43, %45 : vector<8x32xf32>
    %49 = arith.addf %47, %48 : vector<8x32xf32>
    %50 = math.tanh %49 : vector<8x32xf32>
    %51 = arith.mulf %46, %50 : vector<8x32xf32>
    %c2_i32 = arith.constant 2 : i32
    %c8_i32_18 = arith.constant 8 : i32
    %52 = arith.muli %c2_i32, %c8_i32_18 : i32
    %53 = tpu.assume_multiple %52, 8 : i32
    %54 = arith.index_cast %53 : i32 to index
    %c0_19 = arith.constant 0 : index
    %55 = vector.load %arg7[%54, %c0_19] : memref<64x128xf32, #tpu.memory_space<vmem>>, vector<8x128xf32>
    %cst_20 = arith.constant dense<0.000000e+00> : vector<8x128xf32>
    %56 = tpu.matmul %51, %7, %cst_20 {dimension_numbers = #tpu.dot_dimension_numbers<[1], [0], [0], [1], [0, 0, 1, 1], [], []>} : vector<8x32xf32>, vector<32x128xf32>, vector<8x128xf32> -> vector<8x128xf32>
    %57 = arith.addf %55, %56 : vector<8x128xf32>
    %58 = arith.negf %57 : vector<8x128xf32>
    %59 = math.exp %58 : vector<8x128xf32>
    %cst_21 = arith.constant 1.000000e+00 : f32
    %60 = vector.broadcast %cst_21 : f32 to vector<8x128xf32>
    %61 = arith.addf %60, %59 : vector<8x128xf32>
    %62 = arith.divf %60, %61 : vector<8x128xf32>
    %63 = math.tanh %57 : vector<8x128xf32>
    %64 = vector.extract_strided_slice %62 {offsets = [0, 0], sizes = [8, 32], strides = [1, 1]} : vector<8x128xf32> to vector<8x32xf32>
    %65 = vector.extract_strided_slice %62 {offsets = [0, 32], sizes = [8, 32], strides = [1, 1]} : vector<8x128xf32> to vector<8x32xf32>
    %66 = vector.extract_strided_slice %63 {offsets = [0, 64], sizes = [8, 32], strides = [1, 1]} : vector<8x128xf32> to vector<8x32xf32>
    %67 = vector.extract_strided_slice %62 {offsets = [0, 96], sizes = [8, 32], strides = [1, 1]} : vector<8x128xf32> to vector<8x32xf32>
    %68 = arith.mulf %65, %49 : vector<8x32xf32>
    %69 = arith.mulf %64, %66 : vector<8x32xf32>
    %70 = arith.addf %68, %69 : vector<8x32xf32>
    %71 = math.tanh %70 : vector<8x32xf32>
    %72 = arith.mulf %67, %71 : vector<8x32xf32>
    %c3_i32 = arith.constant 3 : i32
    %c8_i32_22 = arith.constant 8 : i32
    %73 = arith.muli %c3_i32, %c8_i32_22 : i32
    %74 = tpu.assume_multiple %73, 8 : i32
    %75 = arith.index_cast %74 : i32 to index
    %c0_23 = arith.constant 0 : index
    %76 = vector.load %arg7[%75, %c0_23] : memref<64x128xf32, #tpu.memory_space<vmem>>, vector<8x128xf32>
    %cst_24 = arith.constant dense<0.000000e+00> : vector<8x128xf32>
    %77 = tpu.matmul %72, %7, %cst_24 {dimension_numbers = #tpu.dot_dimension_numbers<[1], [0], [0], [1], [0, 0, 1, 1], [], []>} : vector<8x32xf32>, vector<32x128xf32>, vector<8x128xf32> -> vector<8x128xf32>
    %78 = arith.addf %76, %77 : vector<8x128xf32>
    %79 = arith.negf %78 : vector<8x128xf32>
    %80 = math.exp %79 : vector<8x128xf32>
    %cst_25 = arith.constant 1.000000e+00 : f32
    %81 = vector.broadcast %cst_25 : f32 to vector<8x128xf32>
    %82 = arith.addf %81, %80 : vector<8x128xf32>
    %83 = arith.divf %81, %82 : vector<8x128xf32>
    %84 = math.tanh %78 : vector<8x128xf32>
    %85 = vector.extract_strided_slice %83 {offsets = [0, 0], sizes = [8, 32], strides = [1, 1]} : vector<8x128xf32> to vector<8x32xf32>
    %86 = vector.extract_strided_slice %83 {offsets = [0, 32], sizes = [8, 32], strides = [1, 1]} : vector<8x128xf32> to vector<8x32xf32>
    %87 = vector.extract_strided_slice %84 {offsets = [0, 64], sizes = [8, 32], strides = [1, 1]} : vector<8x128xf32> to vector<8x32xf32>
    %88 = vector.extract_strided_slice %83 {offsets = [0, 96], sizes = [8, 32], strides = [1, 1]} : vector<8x128xf32> to vector<8x32xf32>
    %89 = arith.mulf %86, %70 : vector<8x32xf32>
    %90 = arith.mulf %85, %87 : vector<8x32xf32>
    %91 = arith.addf %89, %90 : vector<8x32xf32>
    %92 = math.tanh %91 : vector<8x32xf32>
    %93 = arith.mulf %88, %92 : vector<8x32xf32>
    %c4_i32 = arith.constant 4 : i32
    %c8_i32_26 = arith.constant 8 : i32
    %94 = arith.muli %c4_i32, %c8_i32_26 : i32
    %95 = tpu.assume_multiple %94, 8 : i32
    %96 = arith.index_cast %95 : i32 to index
    %c0_27 = arith.constant 0 : index
    %97 = vector.load %arg7[%96, %c0_27] : memref<64x128xf32, #tpu.memory_space<vmem>>, vector<8x128xf32>
    %cst_28 = arith.constant dense<0.000000e+00> : vector<8x128xf32>
    %98 = tpu.matmul %93, %7, %cst_28 {dimension_numbers = #tpu.dot_dimension_numbers<[1], [0], [0], [1], [0, 0, 1, 1], [], []>} : vector<8x32xf32>, vector<32x128xf32>, vector<8x128xf32> -> vector<8x128xf32>
    %99 = arith.addf %97, %98 : vector<8x128xf32>
    %100 = arith.negf %99 : vector<8x128xf32>
    %101 = math.exp %100 : vector<8x128xf32>
    %cst_29 = arith.constant 1.000000e+00 : f32
    %102 = vector.broadcast %cst_29 : f32 to vector<8x128xf32>
    %103 = arith.addf %102, %101 : vector<8x128xf32>
    %104 = arith.divf %102, %103 : vector<8x128xf32>
    %105 = math.tanh %99 : vector<8x128xf32>
    %106 = vector.extract_strided_slice %104 {offsets = [0, 0], sizes = [8, 32], strides = [1, 1]} : vector<8x128xf32> to vector<8x32xf32>
    %107 = vector.extract_strided_slice %104 {offsets = [0, 32], sizes = [8, 32], strides = [1, 1]} : vector<8x128xf32> to vector<8x32xf32>
    %108 = vector.extract_strided_slice %105 {offsets = [0, 64], sizes = [8, 32], strides = [1, 1]} : vector<8x128xf32> to vector<8x32xf32>
    %109 = vector.extract_strided_slice %104 {offsets = [0, 96], sizes = [8, 32], strides = [1, 1]} : vector<8x128xf32> to vector<8x32xf32>
    %110 = arith.mulf %107, %91 : vector<8x32xf32>
    %111 = arith.mulf %106, %108 : vector<8x32xf32>
    %112 = arith.addf %110, %111 : vector<8x32xf32>
    %113 = math.tanh %112 : vector<8x32xf32>
    %114 = arith.mulf %109, %113 : vector<8x32xf32>
    %c5_i32 = arith.constant 5 : i32
    %c8_i32_30 = arith.constant 8 : i32
    %115 = arith.muli %c5_i32, %c8_i32_30 : i32
    %116 = tpu.assume_multiple %115, 8 : i32
    %117 = arith.index_cast %116 : i32 to index
    %c0_31 = arith.constant 0 : index
    %118 = vector.load %arg7[%117, %c0_31] : memref<64x128xf32, #tpu.memory_space<vmem>>, vector<8x128xf32>
    %cst_32 = arith.constant dense<0.000000e+00> : vector<8x128xf32>
    %119 = tpu.matmul %114, %7, %cst_32 {dimension_numbers = #tpu.dot_dimension_numbers<[1], [0], [0], [1], [0, 0, 1, 1], [], []>} : vector<8x32xf32>, vector<32x128xf32>, vector<8x128xf32> -> vector<8x128xf32>
    %120 = arith.addf %118, %119 : vector<8x128xf32>
    %121 = arith.negf %120 : vector<8x128xf32>
    %122 = math.exp %121 : vector<8x128xf32>
    %cst_33 = arith.constant 1.000000e+00 : f32
    %123 = vector.broadcast %cst_33 : f32 to vector<8x128xf32>
    %124 = arith.addf %123, %122 : vector<8x128xf32>
    %125 = arith.divf %123, %124 : vector<8x128xf32>
    %126 = math.tanh %120 : vector<8x128xf32>
    %127 = vector.extract_strided_slice %125 {offsets = [0, 0], sizes = [8, 32], strides = [1, 1]} : vector<8x128xf32> to vector<8x32xf32>
    %128 = vector.extract_strided_slice %125 {offsets = [0, 32], sizes = [8, 32], strides = [1, 1]} : vector<8x128xf32> to vector<8x32xf32>
    %129 = vector.extract_strided_slice %126 {offsets = [0, 64], sizes = [8, 32], strides = [1, 1]} : vector<8x128xf32> to vector<8x32xf32>
    %130 = vector.extract_strided_slice %125 {offsets = [0, 96], sizes = [8, 32], strides = [1, 1]} : vector<8x128xf32> to vector<8x32xf32>
    %131 = arith.mulf %128, %112 : vector<8x32xf32>
    %132 = arith.mulf %127, %129 : vector<8x32xf32>
    %133 = arith.addf %131, %132 : vector<8x32xf32>
    %134 = math.tanh %133 : vector<8x32xf32>
    %135 = arith.mulf %130, %134 : vector<8x32xf32>
    %c6_i32 = arith.constant 6 : i32
    %c8_i32_34 = arith.constant 8 : i32
    %136 = arith.muli %c6_i32, %c8_i32_34 : i32
    %137 = tpu.assume_multiple %136, 8 : i32
    %138 = arith.index_cast %137 : i32 to index
    %c0_35 = arith.constant 0 : index
    %139 = vector.load %arg7[%138, %c0_35] : memref<64x128xf32, #tpu.memory_space<vmem>>, vector<8x128xf32>
    %cst_36 = arith.constant dense<0.000000e+00> : vector<8x128xf32>
    %140 = tpu.matmul %135, %7, %cst_36 {dimension_numbers = #tpu.dot_dimension_numbers<[1], [0], [0], [1], [0, 0, 1, 1], [], []>} : vector<8x32xf32>, vector<32x128xf32>, vector<8x128xf32> -> vector<8x128xf32>
    %141 = arith.addf %139, %140 : vector<8x128xf32>
    %142 = arith.negf %141 : vector<8x128xf32>
    %143 = math.exp %142 : vector<8x128xf32>
    %cst_37 = arith.constant 1.000000e+00 : f32
    %144 = vector.broadcast %cst_37 : f32 to vector<8x128xf32>
    %145 = arith.addf %144, %143 : vector<8x128xf32>
    %146 = arith.divf %144, %145 : vector<8x128xf32>
    %147 = math.tanh %141 : vector<8x128xf32>
    %148 = vector.extract_strided_slice %146 {offsets = [0, 0], sizes = [8, 32], strides = [1, 1]} : vector<8x128xf32> to vector<8x32xf32>
    %149 = vector.extract_strided_slice %146 {offsets = [0, 32], sizes = [8, 32], strides = [1, 1]} : vector<8x128xf32> to vector<8x32xf32>
    %150 = vector.extract_strided_slice %147 {offsets = [0, 64], sizes = [8, 32], strides = [1, 1]} : vector<8x128xf32> to vector<8x32xf32>
    %151 = vector.extract_strided_slice %146 {offsets = [0, 96], sizes = [8, 32], strides = [1, 1]} : vector<8x128xf32> to vector<8x32xf32>
    %152 = arith.mulf %149, %133 : vector<8x32xf32>
    %153 = arith.mulf %148, %150 : vector<8x32xf32>
    %154 = arith.addf %152, %153 : vector<8x32xf32>
    %155 = math.tanh %154 : vector<8x32xf32>
    %156 = arith.mulf %151, %155 : vector<8x32xf32>
    %c7_i32 = arith.constant 7 : i32
    %c8_i32_38 = arith.constant 8 : i32
    %157 = arith.muli %c7_i32, %c8_i32_38 : i32
    %158 = tpu.assume_multiple %157, 8 : i32
    %159 = arith.index_cast %158 : i32 to index
    %c0_39 = arith.constant 0 : index
    %160 = vector.load %arg7[%159, %c0_39] : memref<64x128xf32, #tpu.memory_space<vmem>>, vector<8x128xf32>
    %cst_40 = arith.constant dense<0.000000e+00> : vector<8x128xf32>
    %161 = tpu.matmul %156, %7, %cst_40 {dimension_numbers = #tpu.dot_dimension_numbers<[1], [0], [0], [1], [0, 0, 1, 1], [], []>} : vector<8x32xf32>, vector<32x128xf32>, vector<8x128xf32> -> vector<8x128xf32>
    %162 = arith.addf %160, %161 : vector<8x128xf32>
    %163 = arith.negf %162 : vector<8x128xf32>
    %164 = math.exp %163 : vector<8x128xf32>
    %cst_41 = arith.constant 1.000000e+00 : f32
    %165 = vector.broadcast %cst_41 : f32 to vector<8x128xf32>
    %166 = arith.addf %165, %164 : vector<8x128xf32>
    %167 = arith.divf %165, %166 : vector<8x128xf32>
    %168 = math.tanh %162 : vector<8x128xf32>
    %169 = vector.extract_strided_slice %167 {offsets = [0, 0], sizes = [8, 32], strides = [1, 1]} : vector<8x128xf32> to vector<8x32xf32>
    %170 = vector.extract_strided_slice %167 {offsets = [0, 32], sizes = [8, 32], strides = [1, 1]} : vector<8x128xf32> to vector<8x32xf32>
    %171 = vector.extract_strided_slice %168 {offsets = [0, 64], sizes = [8, 32], strides = [1, 1]} : vector<8x128xf32> to vector<8x32xf32>
    %172 = vector.extract_strided_slice %167 {offsets = [0, 96], sizes = [8, 32], strides = [1, 1]} : vector<8x128xf32> to vector<8x32xf32>
    %173 = arith.mulf %170, %154 : vector<8x32xf32>
    %174 = arith.mulf %169, %171 : vector<8x32xf32>
    %175 = arith.addf %173, %174 : vector<8x32xf32>
    %176 = math.tanh %175 : vector<8x32xf32>
    %177 = arith.mulf %172, %176 : vector<8x32xf32>
    %c8_i32_42 = arith.constant 8 : i32
    %c0_43 = arith.constant 0 : index
    %c0_44 = arith.constant 0 : index
    %178 = vector.load %arg4[%c0_43, %c0_44] : memref<1x32xf32, #tpu.memory_space<vmem>>, vector<1x32xf32>
    %179 = vector.broadcast %178 : vector<1x32xf32> to vector<8x32xf32>
    %180 = arith.mulf %177, %179 : vector<8x32xf32>
    %cst_45 = arith.constant dense<0.000000e+00> : vector<8xf32>
    %181 = vector.multi_reduction <add>, %180, %cst_45 [1] : vector<8x32xf32> to vector<8xf32>
    %182 = vector.shape_cast %181 : vector<8xf32> to vector<8x1xf32>
    %c0_46 = arith.constant 0 : index
    %183 = memref.load %arg5[%c0_46] : memref<1xf32, #tpu.memory_space<smem>>
    %184 = vector.broadcast %183 : f32 to vector<8x1xf32>
    %185 = arith.addf %182, %184 : vector<8x1xf32>
    %c0_47 = arith.constant 0 : index
    %c0_48 = arith.constant 0 : index
    %186 = vector.load %arg6[%c0_47, %c0_48] : memref<8x1xf32, #tpu.memory_space<vmem>>, vector<8x1xf32>
    tpu.vector_store %arg6[%c0_47, %c0_48], %185 {strides = array<i32>} : memref<8x1xf32, #tpu.memory_space<vmem>>, vector<8x1xf32>,
    return
  }
}

</mosaic_0001>

<llo_original>
// kernel: tpu_custom_call.1
$region0: #{tpu_custom_call.1}
  #allocation0 [shape = 'u32[]', space=smem, size = 0x4, offset = 0x4, fixed_abs, tag = 'smem constant byte address 0x4 - core index']
  #allocation1 [shape = 'u32[72,128]{1,0:T(1,128)}', space=vmem, size = 0x9000, scoped, tag = 'internal scratch']
  #allocation2 [shape = 'f32[64,128]{1,0:T(8,128)}', space=vmem, size = 0x8000, scoped, tag = 'scratch operand']
  #allocation3 [shape = 'f32[1]{0:T(128)S(6)}', space=smem, size = 0x200, scoped, tag = 'scoped memory for tpu_custom_call.1']
  %s0 = inlined_call_operand.vmem [shape: f32[64,16], index: 0, kind: input, shape index: {}]
  %s1 = inlined_call_operand.vmem [shape: f32[16,128], index: 1, kind: input, shape index: {}]
  %s2 = inlined_call_operand.vmem [shape: f32[32,128], index: 2, kind: input, shape index: {}]
  %s3 = inlined_call_operand.vmem [shape: f32[1,128], index: 3, kind: input, shape index: {}]
  %s4 = inlined_call_operand.vmem [shape: f32[1,32], index: 4, kind: input, shape index: {}]
  %s5 = inlined_call_operand.<no memory space> [shape: f32[1], index: 5, kind: input, shape index: {}]
  %s6 = inlined_call_operand.vmem [shape: f32[8,1], index: 6, kind: output, shape index: {}]
  %s7 = sld [smem:[#allocation0]]
  $region34: #{tpu_custom_call.1} parent=0
    _
  %s9 = ssub.s32 1, %s7
  %s10 = scalar_select 0, %s9, %s7
  %11 = sst [smem:[#allocation3]] %s5
  // Predicated region
  $region2: #{tpu_custom_call.1} parent=0 // pred_check
    _
  $region3: #{tpu_custom_call.1} parent=0 // pred_check_branch
    %13 = sbr.rel (0) target = $region5
  $region4: #{tpu_custom_call.1} parent=0 // pred_region
    _
  $region5: #{tpu_custom_call.1} parent=0 // pred_fallthru
    _
  // Predicated region
  $region6: #{tpu_custom_call.1} parent=0 // pred_check
    _
  $region7: #{tpu_custom_call.1} parent=0 // pred_check_branch
    %15 = sbr.rel (0) target = $region9
  $region8: #{tpu_custom_call.1} parent=0 // pred_region
    _
  $region9: #{tpu_custom_call.1} parent=0 // pred_fallthru
    _
  // Predicated region
  $region10: #{tpu_custom_call.1} parent=0 // pred_check
    _
  $region11: #{tpu_custom_call.1} parent=0 // pred_check_branch
    %17 = sbr.rel (0) target = $region13
  $region12: #{tpu_custom_call.1} parent=0 // pred_region
    _
  $region13: #{tpu_custom_call.1} parent=0 // pred_fallthru
    _
  // Predicated region
  $region14: #{tpu_custom_call.1} parent=0 // pred_check
    _
  $region15: #{tpu_custom_call.1} parent=0 // pred_check_branch
    %19 = sbr.rel (0) target = $region17
  $region16: #{tpu_custom_call.1} parent=0 // pred_region
    _
  $region17: #{tpu_custom_call.1} parent=0 // pred_fallthru
    _
  // Predicated region
  $region18: #{tpu_custom_call.1} parent=0 // pred_check
    _
  $region19: #{tpu_custom_call.1} parent=0 // pred_check_branch
    %21 = sbr.rel (0) target = $region21
  $region20: #{tpu_custom_call.1} parent=0 // pred_region
    _
  $region21: #{tpu_custom_call.1} parent=0 // pred_fallthru
    _
  // Predicated region
  $region22: #{tpu_custom_call.1} parent=0 // pred_check
    _
  $region23: #{tpu_custom_call.1} parent=0 // pred_check_branch
    %23 = sbr.rel (0) target = $region25
  $region24: #{tpu_custom_call.1} parent=0 // pred_region
    _
  $region25: #{tpu_custom_call.1} parent=0 // pred_fallthru
    _
  %v24 = vld [vmem:[%s0] sm:$0xff]
  %v25 = vld [vmem:[%s0 + $0x8] sm:$0xff]
  %v26 = vld [vmem:[%s0 + $0x10] sm:$0xff]
  %v27 = vld [vmem:[%s0 + $0x18] sm:$0xff]
  %v28 = vld [vmem:[%s0 + $0x20] sm:$0xff]
  %v29 = vld [vmem:[%s0 + $0x28] sm:$0xff]
  %v30 = vld [vmem:[%s0 + $0x30] sm:$0xff]
  %v31 = vld [vmem:[%s0 + $0x38] sm:$0xff]
  %v32 = vld [vmem:[%s1] sm:$0xff]
  %v33 = vld [vmem:[%s1 + $0x8] sm:$0xff]
  %v34 = vld [vmem:[%s3] sm:$0x1]
  %v36 = vperm.slane %v34, 0
  %vm38 = vcmask 130048
  %v40 = vsel %vm38, %v24, 0
  %v43 = vsel %vm38, %v25, 0
  %v46 = vsel %vm38, %v26, 0
  %v49 = vsel %vm38, %v27, 0
  %v52 = vsel %vm38, %v28, 0
  %v55 = vsel %vm38, %v29, 0
  %v58 = vsel %vm38, %v30, 0
  %v61 = vsel %vm38, %v31, 0
  %63 = vmatpush.msra.mxu0 0.0
  %64 = vmatpush.msra.mxu0 0.0
  %65 = vmatpush.msra.mxu0 0.0
  %66 = vmatpush.msra.mxu0 0.0
  %67 = vmatpush.msra.mxu0 0.0
  %68 = vmatpush.msra.mxu0 0.0
  %69 = vmatpush.msra.mxu0 0.0
  %70 = vmatpush.msra.mxu0 0.0
  %71 = vmatpush.msra.mxu0 0.0
  %72 = vmatpush.msra.mxu0 0.0
  %73 = vmatpush.msra.mxu0 0.0
  %74 = vmatpush.msra.mxu0 0.0
  %75 = vmatpush.msra.mxu0 0.0
  %76 = vmatpush.msra.mxu0 0.0
  %77 = vmatpush.msra.mxu0 %v33
  %78 = vmatpush.msra.mxu0 %v32
  %79 = vmatmul.f32.gmra.mxu0 %v40
  %v80 = vpop.f32.mrf.mxu0
  %v81 = vadd.f32 %v36, %v80
  %82 = vmatmul.f32.gmra.mxu0 %v43
  %v83 = vpop.f32.mrf.mxu0
  %v84 = vadd.f32 %v36, %v83
  %85 = vmatmul.f32.gmra.mxu0 %v46
  %v86 = vpop.f32.mrf.mxu0
  %v87 = vadd.f32 %v36, %v86
  %88 = vmatmul.f32.gmra.mxu0 %v49
  %v89 = vpop.f32.mrf.mxu0
  %v90 = vadd.f32 %v36, %v89
  %91 = vmatmul.f32.gmra.mxu0 %v52
  %v92 = vpop.f32.mrf.mxu0
  %v93 = vadd.f32 %v36, %v92
  %94 = vmatmul.f32.gmra.mxu0 %v55
  %v95 = vpop.f32.mrf.mxu0
  %v96 = vadd.f32 %v36, %v95
  %97 = vmatmul.f32.gmra.mxu0 %v58
  %v98 = vpop.f32.mrf.mxu0
  %v99 = vadd.f32 %v36, %v98
  %100 = vmatmul.f32.gmra.mxu0 %v61
  %v101 = vpop.f32.mrf.mxu0
  %v102 = vadd.f32 %v36, %v101
  %103 = vdwg.mxu0
  %104 = vst [vmem:[#allocation2] sm:$0xff] %v81
  %105 = vst [vmem:[#allocation2 + $0x8] sm:$0xff] %v84
  %106 = vst [vmem:[#allocation2 + $0x10] sm:$0xff] %v87
  %107 = vst [vmem:[#allocation2 + $0x18] sm:$0xff] %v90
  %108 = vst [vmem:[#allocation2 + $0x20] sm:$0xff] %v93
  %109 = vst [vmem:[#allocation2 + $0x28] sm:$0xff] %v96
  %110 = vst [vmem:[#allocation2 + $0x30] sm:$0xff] %v99
  %111 = vst [vmem:[#allocation2 + $0x38] sm:$0xff] %v102
  %v112 = vld [vmem:[%s2] sm:$0xff]
  %v113 = vld [vmem:[%s2 + $0x8] sm:$0xff]
  %v114 = vld [vmem:[%s2 + $0x10] sm:$0xff]
  %v115 = vld [vmem:[%s2 + $0x18] sm:$0xff]
  %v116 = vld [vmem:[#allocation2] sm:$0xff]
  %vm117 = vcmask 261120
  %v119 = vsel %vm117, 0.0, 0
  %121 = vmatpush.msra.mxu0 0.0
  %122 = vmatpush.msra.mxu0 0.0
  %123 = vmatpush.msra.mxu0 0.0
  %124 = vmatpush.msra.mxu0 0.0
  %125 = vmatpush.msra.mxu0 0.0
  %126 = vmatpush.msra.mxu0 0.0
  %127 = vmatpush.msra.mxu0 0.0
  %128 = vmatpush.msra.mxu0 0.0
  %129 = vmatpush.msra.mxu0 0.0
  %130 = vmatpush.msra.mxu0 0.0
  %131 = vmatpush.msra.mxu0 0.0
  %132 = vmatpush.msra.mxu0 0.0
  %133 = vmatpush.msra.mxu0 %v115
  %134 = vmatpush.msra.mxu0 %v114
  %135 = vmatpush.msra.mxu0 %v113
  %136 = vmatpush.msra.mxu0 %v112
  %137 = vmatmul.f32.gmra.mxu0 %v119
  %v138 = vpop.f32.mrf.mxu0
  %v139 = vadd.f32 0.0, %v138
  %140 = vdwg.mxu0
  %v141 = vadd.f32 %v116, %v139
  %v142 = vxor.u32 %v141, 2147483648
  %v143 = vmul.f32 %v142, 1.442695
  %v144 = vpow.pop %v143
  %v145 = vadd.f32 %v144, 1.0
  %v146 = vrcp.pop %v145
  %v147 = vmul.f32 %v145, %v146
  %v148 = vsub.f32 1.0, %v147
  %v149 = vmul.f32 %v146, %v148
  %v150 = vadd.f32 %v146, %v149
  %vm151 = vweird.f32 %v145
  %vm152 = vweird.f32 %v146
  %vm153 = vmor %vm151, %vm152
  %v154 = vsel %vm153, %v146, %v150
  %v155 = vand.u32 2147483647, %v145
  %vm156 = vcmp.eq.f32.partialorder %v155, 8.507059e+37
  %v157 = vand.u32 %v145, 2147483648
  %v158 = vor.u32 1.1754944e-38, %v157
  %v159 = vsel %vm156, %v158, %v154
  %v160 = vmul.f32 1.0, %v159
  %v161 = vtanh.pop %v141
  %v162 = vmul.f32 %v160, 0.0
  %164 = vrot.lane.b32.xlu0 %v161, 64
  %v165 = vpop.permute.xlu0 %164
  %v167 = vmul.f32 %v160, %v165
  %169 = vrot.lane.b32.xlu0 %v167, 32
  %v170 = vpop.permute.xlu0 %169
  %v172 = vadd.f32 %v162, %v170
  %v173 = vtanh.pop %v172
  %175 = vrot.lane.b32.xlu0 %v173, 64
  %v176 = vpop.permute.xlu0 %175
  %v178 = vmul.f32 %v160, %v176
  %s179 = scalar_lea.vmem [#allocation2], 8
  %v180 = vld [vmem:[%s179] sm:$0xff]
  %182 = vrot.lane.b32.xlu0 %v178, 32
  %v183 = vpop.permute.xlu0 %182
  %v184 = vsel %vm117, %v183, 0
  %186 = vmatpush.msra.mxu0 0.0
  %187 = vmatpush.msra.mxu0 0.0
  %188 = vmatpush.msra.mxu0 0.0
  %189 = vmatpush.msra.mxu0 0.0
  %190 = vmatpush.msra.mxu0 0.0
  %191 = vmatpush.msra.mxu0 0.0
  %192 = vmatpush.msra.mxu0 0.0
  %193 = vmatpush.msra.mxu0 0.0
  %194 = vmatpush.msra.mxu0 0.0
  %195 = vmatpush.msra.mxu0 0.0
  %196 = vmatpush.msra.mxu0 0.0
  %197 = vmatpush.msra.mxu0 0.0
  %198 = vmatpush.msra.mxu0 %v115
  %199 = vmatpush.msra.mxu0 %v114
  %200 = vmatpush.msra.mxu0 %v113
  %201 = vmatpush.msra.mxu0 %v112
  %202 = vmatmul.f32.gmra.mxu0 %v184
  %v203 = vpop.f32.mrf.mxu0
  %v204 = vadd.f32 0.0, %v203
  %205 = vdwg.mxu0
  %v206 = vadd.f32 %v180, %v204
  %v207 = vxor.u32 %v206, 2147483648
  %v208 = vmul.f32 %v207, 1.442695
  %v209 = vpow.pop %v208
  %v210 = vadd.f32 %v209, 1.0
  %v211 = vrcp.pop %v210
  %v212 = vmul.f32 %v210, %v211
  %v213 = vsub.f32 1.0, %v212
  %v214 = vmul.f32 %v211, %v213
  %v215 = vadd.f32 %v211, %v214
  %vm216 = vweird.f32 %v210
  %vm217 = vweird.f32 %v211
  %vm218 = vmor %vm216, %vm217
  %v219 = vsel %vm218, %v211, %v215
  %v220 = vand.u32 2147483647, %v210
  %vm221 = vcmp.eq.f32.partialorder %v220, 8.507059e+37
  %v222 = vand.u32 %v210, 2147483648
  %v223 = vor.u32 1.1754944e-38, %v222
  %v224 = vsel %vm221, %v223, %v219
  %v225 = vmul.f32 1.0, %v224
  %v226 = vtanh.pop %v206
  %v227 = vmul.f32 %v225, %v172
  %229 = vrot.lane.b32.xlu0 %v226, 64
  %v230 = vpop.permute.xlu0 %229
  %v232 = vmul.f32 %v225, %v230
  %234 = vrot.lane.b32.xlu0 %v232, 32
  %v235 = vpop.permute.xlu0 %234
  %v237 = vadd.f32 %v227, %v235
  %v238 = vtanh.pop %v237
  %240 = vrot.lane.b32.xlu0 %v238, 64
  %v241 = vpop.permute.xlu0 %240
  %v243 = vmul.f32 %v225, %v241
  %s244 = scalar_lea.vmem [#allocation2], 16
  %v245 = vld [vmem:[%s244] sm:$0xff]
  %247 = vrot.lane.b32.xlu0 %v243, 32
  %v248 = vpop.permute.xlu0 %247
  %v249 = vsel %vm117, %v248, 0
  %251 = vmatpush.msra.mxu0 0.0
  %252 = vmatpush.msra.mxu0 0.0
  %253 = vmatpush.msra.mxu0 0.0
  %254 = vmatpush.msra.mxu0 0.0
  %255 = vmatpush.msra.mxu0 0.0
  %256 = vmatpush.msra.mxu0 0.0
  %257 = vmatpush.msra.mxu0 0.0
  %258 = vmatpush.msra.mxu0 0.0
  %259 = vmatpush.msra.mxu0 0.0
  %260 = vmatpush.msra.mxu0 0.0
  %261 = vmatpush.msra.mxu0 0.0
  %262 = vmatpush.msra.mxu0 0.0
  %263 = vmatpush.msra.mxu0 %v115
  %264 = vmatpush.msra.mxu0 %v114
  %265 = vmatpush.msra.mxu0 %v113
  %266 = vmatpush.msra.mxu0 %v112
  %267 = vmatmul.f32.gmra.mxu0 %v249
  %v268 = vpop.f32.mrf.mxu0
  %v269 = vadd.f32 0.0, %v268
  %270 = vdwg.mxu0
  %v271 = vadd.f32 %v245, %v269
  %v272 = vxor.u32 %v271, 2147483648
  %v273 = vmul.f32 %v272, 1.442695
  %v274 = vpow.pop %v273
  %v275 = vadd.f32 %v274, 1.0
  %v276 = vrcp.pop %v275
  %v277 = vmul.f32 %v275, %v276
  %v278 = vsub.f32 1.0, %v277
  %v279 = vmul.f32 %v276, %v278
  %v280 = vadd.f32 %v276, %v279
  %vm281 = vweird.f32 %v275
  %vm282 = vweird.f32 %v276
  %vm283 = vmor %vm281, %vm282
  %v284 = vsel %vm283, %v276, %v280
  %v285 = vand.u32 2147483647, %v275
  %vm286 = vcmp.eq.f32.partialorder %v285, 8.507059e+37
  %v287 = vand.u32 %v275, 2147483648
  %v288 = vor.u32 1.1754944e-38, %v287
  %v289 = vsel %vm286, %v288, %v284
  %v290 = vmul.f32 1.0, %v289
  %v291 = vtanh.pop %v271
  %v292 = vmul.f32 %v290, %v237
  %294 = vrot.lane.b32.xlu0 %v291, 64
  %v295 = vpop.permute.xlu0 %294
  %v297 = vmul.f32 %v290, %v295
  %299 = vrot.lane.b32.xlu0 %v297, 32
  %v300 = vpop.permute.xlu0 %299
  %v302 = vadd.f32 %v292, %v300
  %v303 = vtanh.pop %v302
  %305 = vrot.lane.b32.xlu0 %v303, 64
  %v306 = vpop.permute.xlu0 %305
  %v308 = vmul.f32 %v290, %v306
  %s309 = scalar_lea.vmem [#allocation2], 24
  %v310 = vld [vmem:[%s309] sm:$0xff]
  %312 = vrot.lane.b32.xlu0 %v308, 32
  %v313 = vpop.permute.xlu0 %312
  %v314 = vsel %vm117, %v313, 0
  %316 = vmatpush.msra.mxu0 0.0
  %317 = vmatpush.msra.mxu0 0.0
  %318 = vmatpush.msra.mxu0 0.0
  %319 = vmatpush.msra.mxu0 0.0
  %320 = vmatpush.msra.mxu0 0.0
  %321 = vmatpush.msra.mxu0 0.0
  %322 = vmatpush.msra.mxu0 0.0
  %323 = vmatpush.msra.mxu0 0.0
  %324 = vmatpush.msra.mxu0 0.0
  %325 = vmatpush.msra.mxu0 0.0
  %326 = vmatpush.msra.mxu0 0.0
  %327 = vmatpush.msra.mxu0 0.0
  %328 = vmatpush.msra.mxu0 %v115
  %329 = vmatpush.msra.mxu0 %v114
  %330 = vmatpush.msra.mxu0 %v113
  %331 = vmatpush.msra.mxu0 %v112
  %332 = vmatmul.f32.gmra.mxu0 %v314
  %v333 = vpop.f32.mrf.mxu0
  %v334 = vadd.f32 0.0, %v333
  %335 = vdwg.mxu0
  %v336 = vadd.f32 %v310, %v334
  %v337 = vxor.u32 %v336, 2147483648
  %v338 = vmul.f32 %v337, 1.442695
  %v339 = vpow.pop %v338
  %v340 = vadd.f32 %v339, 1.0
  %v341 = vrcp.pop %v340
  %v342 = vmul.f32 %v340, %v341
  %v343 = vsub.f32 1.0, %v342
  %v344 = vmul.f32 %v341, %v343
  %v345 = vadd.f32 %v341, %v344
  %vm346 = vweird.f32 %v340
  %vm347 = vweird.f32 %v341
  %vm348 = vmor %vm346, %vm347
  %v349 = vsel %vm348, %v341, %v345
  %v350 = vand.u32 2147483647, %v340
  %vm351 = vcmp.eq.f32.partialorder %v350, 8.507059e+37
  %v352 = vand.u32 %v340, 2147483648
  %v353 = vor.u32 1.1754944e-38, %v352
  %v354 = vsel %vm351, %v353, %v349
  %v355 = vmul.f32 1.0, %v354
  %v356 = vtanh.pop %v336
  %v357 = vmul.f32 %v355, %v302
  %359 = vrot.lane.b32.xlu0 %v356, 64
  %v360 = vpop.permute.xlu0 %359
  %v362 = vmul.f32 %v355, %v360
  %364 = vrot.lane.b32.xlu0 %v362, 32
  %v365 = vpop.permute.xlu0 %364
  %v367 = vadd.f32 %v357, %v365
  %v368 = vtanh.pop %v367
  %370 = vrot.lane.b32.xlu0 %v368, 64
  %v371 = vpop.permute.xlu0 %370
  %v373 = vmul.f32 %v355, %v371
  %s374 = scalar_lea.vmem [#allocation2], 32
  %v375 = vld [vmem:[%s374] sm:$0xff]
  %377 = vrot.lane.b32.xlu0 %v373, 32
  %v378 = vpop.permute.xlu0 %377
  %v379 = vsel %vm117, %v378, 0
  %381 = vmatpush.msra.mxu0 0.0
  %382 = vmatpush.msra.mxu0 0.0
  %383 = vmatpush.msra.mxu0 0.0
  %384 = vmatpush.msra.mxu0 0.0
  %385 = vmatpush.msra.mxu0 0.0
  %386 = vmatpush.msra.mxu0 0.0
  %387 = vmatpush.msra.mxu0 0.0
  %388 = vmatpush.msra.mxu0 0.0
  %389 = vmatpush.msra.mxu0 0.0
  %390 = vmatpush.msra.mxu0 0.0
  %391 = vmatpush.msra.mxu0 0.0
  %392 = vmatpush.msra.mxu0 0.0
  %393 = vmatpush.msra.mxu0 %v115
  %394 = vmatpush.msra.mxu0 %v114
  %395 = vmatpush.msra.mxu0 %v113
  %396 = vmatpush.msra.mxu0 %v112
  %397 = vmatmul.f32.gmra.mxu0 %v379
  %v398 = vpop.f32.mrf.mxu0
  %v399 = vadd.f32 0.0, %v398
  %400 = vdwg.mxu0
  %v401 = vadd.f32 %v375, %v399
  %v402 = vxor.u32 %v401, 2147483648
  %v403 = vmul.f32 %v402, 1.442695
  %v404 = vpow.pop %v403
  %v405 = vadd.f32 %v404, 1.0
  %v406 = vrcp.pop %v405
  %v407 = vmul.f32 %v405, %v406
  %v408 = vsub.f32 1.0, %v407
  %v409 = vmul.f32 %v406, %v408
  %v410 = vadd.f32 %v406, %v409
  %vm411 = vweird.f32 %v405
  %vm412 = vweird.f32 %v406
  %vm413 = vmor %vm411, %vm412
  %v414 = vsel %vm413, %v406, %v410
  %v415 = vand.u32 2147483647, %v405
  %vm416 = vcmp.eq.f32.partialorder %v415, 8.507059e+37
  %v417 = vand.u32 %v405, 2147483648
  %v418 = vor.u32 1.1754944e-38, %v417
  %v419 = vsel %vm416, %v418, %v414
  %v420 = vmul.f32 1.0, %v419
  %v421 = vtanh.pop %v401
  %v422 = vmul.f32 %v420, %v367
  %424 = vrot.lane.b32.xlu0 %v421, 64
  %v425 = vpop.permute.xlu0 %424
  %v427 = vmul.f32 %v420, %v425
  %429 = vrot.lane.b32.xlu0 %v427, 32
  %v430 = vpop.permute.xlu0 %429
  %v432 = vadd.f32 %v422, %v430
  %v433 = vtanh.pop %v432
  %435 = vrot.lane.b32.xlu0 %v433, 64
  %v436 = vpop.permute.xlu0 %435
  %v438 = vmul.f32 %v420, %v436
  %s439 = scalar_lea.vmem [#allocation2], 40
  %v440 = vld [vmem:[%s439] sm:$0xff]
  %442 = vrot.lane.b32.xlu0 %v438, 32
  %v443 = vpop.permute.xlu0 %442
  %v444 = vsel %vm117, %v443, 0
  %446 = vmatpush.msra.mxu0 0.0
  %447 = vmatpush.msra.mxu0 0.0
  %448 = vmatpush.msra.mxu0 0.0
  %449 = vmatpush.msra.mxu0 0.0
  %450 = vmatpush.msra.mxu0 0.0
  %451 = vmatpush.msra.mxu0 0.0
  %452 = vmatpush.msra.mxu0 0.0
  %453 = vmatpush.msra.mxu0 0.0
  %454 = vmatpush.msra.mxu0 0.0
  %455 = vmatpush.msra.mxu0 0.0
  %456 = vmatpush.msra.mxu0 0.0
  %457 = vmatpush.msra.mxu0 0.0
  %458 = vmatpush.msra.mxu0 %v115
  %459 = vmatpush.msra.mxu0 %v114
  %460 = vmatpush.msra.mxu0 %v113
  %461 = vmatpush.msra.mxu0 %v112
  %462 = vmatmul.f32.gmra.mxu0 %v444
  %v463 = vpop.f32.mrf.mxu0
  %v464 = vadd.f32 0.0, %v463
  %465 = vdwg.mxu0
  %v466 = vadd.f32 %v440, %v464
  %v467 = vxor.u32 %v466, 2147483648
  %v468 = vmul.f32 %v467, 1.442695
  %v469 = vpow.pop %v468
  %v470 = vadd.f32 %v469, 1.0
  %v471 = vrcp.pop %v470
  %v472 = vmul.f32 %v470, %v471
  %v473 = vsub.f32 1.0, %v472
  %v474 = vmul.f32 %v471, %v473
  %v475 = vadd.f32 %v471, %v474
  %vm476 = vweird.f32 %v470
  %vm477 = vweird.f32 %v471
  %vm478 = vmor %vm476, %vm477
  %v479 = vsel %vm478, %v471, %v475
  %v480 = vand.u32 2147483647, %v470
  %vm481 = vcmp.eq.f32.partialorder %v480, 8.507059e+37
  %v482 = vand.u32 %v470, 2147483648
  %v483 = vor.u32 1.1754944e-38, %v482
  %v484 = vsel %vm481, %v483, %v479
  %v485 = vmul.f32 1.0, %v484
  %v486 = vtanh.pop %v466
  %v487 = vmul.f32 %v485, %v432
  %489 = vrot.lane.b32.xlu0 %v486, 64
  %v490 = vpop.permute.xlu0 %489
  %v492 = vmul.f32 %v485, %v490
  %494 = vrot.lane.b32.xlu0 %v492, 32
  %v495 = vpop.permute.xlu0 %494
  %v497 = vadd.f32 %v487, %v495
  %v498 = vtanh.pop %v497
  %500 = vrot.lane.b32.xlu0 %v498, 64
  %v501 = vpop.permute.xlu0 %500
  %v503 = vmul.f32 %v485, %v501
  %s504 = scalar_lea.vmem [#allocation2], 48
  %v505 = vld [vmem:[%s504] sm:$0xff]
  %507 = vrot.lane.b32.xlu0 %v503, 32
  %v508 = vpop.permute.xlu0 %507
  %v509 = vsel %vm117, %v508, 0
  %511 = vmatpush.msra.mxu0 0.0
  %512 = vmatpush.msra.mxu0 0.0
  %513 = vmatpush.msra.mxu0 0.0
  %514 = vmatpush.msra.mxu0 0.0
  %515 = vmatpush.msra.mxu0 0.0
  %516 = vmatpush.msra.mxu0 0.0
  %517 = vmatpush.msra.mxu0 0.0
  %518 = vmatpush.msra.mxu0 0.0
  %519 = vmatpush.msra.mxu0 0.0
  %520 = vmatpush.msra.mxu0 0.0
  %521 = vmatpush.msra.mxu0 0.0
  %522 = vmatpush.msra.mxu0 0.0
  %523 = vmatpush.msra.mxu0 %v115
  %524 = vmatpush.msra.mxu0 %v114
  %525 = vmatpush.msra.mxu0 %v113
  %526 = vmatpush.msra.mxu0 %v112
  %527 = vmatmul.f32.gmra.mxu0 %v509
  %v528 = vpop.f32.mrf.mxu0
  %v529 = vadd.f32 0.0, %v528
  %530 = vdwg.mxu0
  %v531 = vadd.f32 %v505, %v529
  %v532 = vxor.u32 %v531, 2147483648
  %v533 = vmul.f32 %v532, 1.442695
  %v534 = vpow.pop %v533
  %v535 = vadd.f32 %v534, 1.0
  %v536 = vrcp.pop %v535
  %v537 = vmul.f32 %v535, %v536
  %v538 = vsub.f32 1.0, %v537
  %v539 = vmul.f32 %v536, %v538
  %v540 = vadd.f32 %v536, %v539
  %vm541 = vweird.f32 %v535
  %vm542 = vweird.f32 %v536
  %vm543 = vmor %vm541, %vm542
  %v544 = vsel %vm543, %v536, %v540
  %v545 = vand.u32 2147483647, %v535
  %vm546 = vcmp.eq.f32.partialorder %v545, 8.507059e+37
  %v547 = vand.u32 %v535, 2147483648
  %v548 = vor.u32 1.1754944e-38, %v547
  %v549 = vsel %vm546, %v548, %v544
  %v550 = vmul.f32 1.0, %v549
  %v551 = vtanh.pop %v531
  %v552 = vmul.f32 %v550, %v497
  %554 = vrot.lane.b32.xlu0 %v551, 64
  %v555 = vpop.permute.xlu0 %554
  %v557 = vmul.f32 %v550, %v555
  %559 = vrot.lane.b32.xlu0 %v557, 32
  %v560 = vpop.permute.xlu0 %559
  %v562 = vadd.f32 %v552, %v560
  %v563 = vtanh.pop %v562
  %565 = vrot.lane.b32.xlu0 %v563, 64
  %v566 = vpop.permute.xlu0 %565
  %v568 = vmul.f32 %v550, %v566
  %s569 = scalar_lea.vmem [#allocation2], 56
  %v570 = vld [vmem:[%s569] sm:$0xff]
  %572 = vrot.lane.b32.xlu0 %v568, 32
  %v573 = vpop.permute.xlu0 %572
  %v574 = vsel %vm117, %v573, 0
  %576 = vmatpush.msra.mxu0 0.0
  %577 = vmatpush.msra.mxu0 0.0
  %578 = vmatpush.msra.mxu0 0.0
  %579 = vmatpush.msra.mxu0 0.0
  %580 = vmatpush.msra.mxu0 0.0
  %581 = vmatpush.msra.mxu0 0.0
  %582 = vmatpush.msra.mxu0 0.0
  %583 = vmatpush.msra.mxu0 0.0
  %584 = vmatpush.msra.mxu0 0.0
  %585 = vmatpush.msra.mxu0 0.0
  %586 = vmatpush.msra.mxu0 0.0
  %587 = vmatpush.msra.mxu0 0.0
  %588 = vmatpush.msra.mxu0 %v115
  %589 = vmatpush.msra.mxu0 %v114
  %590 = vmatpush.msra.mxu0 %v113
  %591 = vmatpush.msra.mxu0 %v112
  %592 = vmatmul.f32.gmra.mxu0 %v574
  %v593 = vpop.f32.mrf.mxu0
  %v594 = vadd.f32 0.0, %v593
  %595 = vdwg.mxu0
  %v596 = vadd.f32 %v570, %v594
  %v597 = vxor.u32 %v596, 2147483648
  %v598 = vmul.f32 %v597, 1.442695
  %v599 = vpow.pop %v598
  %v600 = vadd.f32 %v599, 1.0
  %v601 = vrcp.pop %v600
  %v602 = vmul.f32 %v600, %v601
  %v603 = vsub.f32 1.0, %v602
  %v604 = vmul.f32 %v601, %v603
  %v605 = vadd.f32 %v601, %v604
  %vm606 = vweird.f32 %v600
  %vm607 = vweird.f32 %v601
  %vm608 = vmor %vm606, %vm607
  %v609 = vsel %vm608, %v601, %v605
  %v610 = vand.u32 2147483647, %v600
  %vm611 = vcmp.eq.f32.partialorder %v610, 8.507059e+37
  %v612 = vand.u32 %v600, 2147483648
  %v613 = vor.u32 1.1754944e-38, %v612
  %v614 = vsel %vm611, %v613, %v609
  %v615 = vmul.f32 1.0, %v614
  %v616 = vtanh.pop %v596
  %v617 = vmul.f32 %v615, %v562
  %619 = vrot.lane.b32.xlu0 %v616, 64
  %v620 = vpop.permute.xlu0 %619
  %v622 = vmul.f32 %v615, %v620
  %624 = vrot.lane.b32.xlu0 %v622, 32
  %v625 = vpop.permute.xlu0 %624
  %v627 = vadd.f32 %v617, %v625
  %v628 = vtanh.pop %v627
  %630 = vrot.lane.b32.xlu0 %v628, 64
  %v631 = vpop.permute.xlu0 %630
  %v633 = vmul.f32 %v615, %v631
  %v634 = vld [vmem:[%s4] sm:$0x1]
  %v636 = vperm.slane %v634, 0
  %637 = vrot.lane.b32.xlu0 %v636, 96
  %v638 = vpop.permute.xlu0 %637
  %v640 = vmul.f32 %v633, %v638
  %642 = vrot.lane.b32.xlu0 %v640, 32
  %v643 = vpop.permute.xlu0 %642
  %v645 = vsel %vm117, %v643, 0.0
  %646 = vadd.xlane.f32.xlu0 %v645
  %v647 = vpop.xlane.xlu0 %646
  %s648 = sld [smem:[#allocation3]]
  %v649 = vstv %s648
  %v650 = vadd.f32 %v647, %v649
  %vm651 = vcmask 7168
  %652 = vst.msk [vmem:[%s6] sm:$0xff] %vm651, %v650
  // Predicated region
  $region26: #{tpu_custom_call.1} parent=0 // pred_check
    _
  $region27: #{tpu_custom_call.1} parent=0 // pred_check_branch
    %654 = sbr.rel (0) target = $region29
  $region28: #{tpu_custom_call.1} parent=0 // pred_region
    _
  $region29: #{tpu_custom_call.1} parent=0 // pred_fallthru
    _
  // Predicated region
  $region30: #{tpu_custom_call.1} parent=0 // pred_check
    _
  $region31: #{tpu_custom_call.1} parent=0 // pred_check_branch
    %656 = sbr.rel (0) target = $region33
  $region32: #{tpu_custom_call.1} parent=0 // pred_region
    _
  $region33: #{tpu_custom_call.1} parent=0 // pred_fallthru
    _

</llo_original>
